<compile_context>
chip_gen: v5e
topology: v5e:2x2
jax: 0.10.0
libtpu: 0.0.40
codegen_flags: <defaults>
</compile_context>

<pallas_src>
import functools

import jax
import jax.numpy as jnp
from jax import lax
from jax.experimental import pallas as pl
from jax.experimental.pallas import tpu as pltpu

_LANE = 128
_MAX_BLOCK_ROWS = 1024  # (1024, 128) f32 = 512 KiB per block


def _mix(v):
    """32-bit integer finalizer (murmur/prospector style) on uint32 vregs."""
    v = v ^ (v >> jnp.uint32(16))
    v = v * jnp.uint32(0x7FEB352D)
    v = v ^ (v >> jnp.uint32(15))
    v = v * jnp.uint32(0x846CA68B)
    v = v ^ (v >> jnp.uint32(16))
    return v


def _bits_to_unit(bits):
    """uint32 -> float32 in [1.0, 2.0) via the mantissa bit trick."""
    f_bits = (bits >> jnp.uint32(9)) | jnp.uint32(0x3F800000)
    return lax.bitcast_convert_type(f_bits, jnp.float32)


def _noise_kernel(seed_ref, x_ref, o_ref, *, sigma):
    rows, lanes = x_ref.shape          # static block shape, rows % 16 == 0
    half = rows // 2

    sigma_f = jnp.float32(sigma)       # hoisted scalar

    # ---- stateless counter-based PRNG (pure jnp/lax ops) -------------------
    pid = pl.program_id(0).astype(jnp.uint32)
    key = seed_ref[0].astype(jnp.uint32)

    row = lax.broadcasted_iota(jnp.uint32, (half, lanes), 0)
    col = lax.broadcasted_iota(jnp.uint32, (half, lanes), 1)
    counter = pid * jnp.uint32(rows * lanes) + row * jnp.uint32(lanes) + col

    h = _mix(counter ^ key)
    bits1 = _mix(h ^ jnp.uint32(0x9E3779B9))
    bits2 = _mix(h + jnp.uint32(0x6A09E667))

    # ---- Box-Muller, both branches (2 normals per uniform pair) ------------
    u1 = jnp.float32(2.0) - _bits_to_unit(bits1)          # (0, 1]
    u2 = _bits_to_unit(bits2) - jnp.float32(1.0)          # [0, 1)
    r = jnp.sqrt(jnp.float32(-2.0) * jnp.log(u1))
    theta = jnp.float32(2.0 * 3.14159265358979323846) * u2
    z_cos = r * jnp.cos(theta)
    z_sin = r * jnp.sin(theta)

    # ---- add noise, store in the input dtype --------------------------------
    x_lo = x_ref[:half, :].astype(jnp.float32)
    x_hi = x_ref[half:, :].astype(jnp.float32)
    o_ref[:half, :] = (x_lo + sigma_f * z_cos).astype(o_ref.dtype)
    o_ref[half:, :] = (x_hi + sigma_f * z_sin).astype(o_ref.dtype)


def noise_forward(x, *, use_noise=True, sigma=0.2, seed=0):
    """Equivalent of Noise(use_noise, sigma).forward(x)."""
    if not use_noise:
        return x

    orig_shape = x.shape
    orig_dtype = x.dtype

    flat = x.reshape(-1)
    n = flat.shape[0]

    # Block rows: multiple of 16 (so the half-split stays sublane aligned),
    # capped at _MAX_BLOCK_ROWS.
    rows_needed = -(-n // _LANE)
    block_rows = min(_MAX_BLOCK_ROWS, ((rows_needed + 15) // 16) * 16)
    block_elems = block_rows * _LANE

    n_pad = -(-n // block_elems) * block_elems
    if n_pad != n:
        flat = jnp.pad(flat, (0, n_pad - n))
    x2d = flat.reshape(-1, _LANE)
    m = x2d.shape[0]
    grid = m // block_rows

    seed_arr = jnp.array([seed], dtype=jnp.int32)

    cost = pl.CostEstimate(
        flops=12 * n_pad,
        transcendentals=2 * n_pad,
        bytes_accessed=2 * n_pad * x2d.dtype.itemsize,
    )

    out2d = pl.pallas_call(
        functools.partial(_noise_kernel, sigma=float(sigma)),
        out_shape=jax.ShapeDtypeStruct((m, _LANE), orig_dtype),
        grid_spec=pltpu.PrefetchScalarGridSpec(
            num_scalar_prefetch=1,
            grid=(grid,),
            in_specs=[pl.BlockSpec((block_rows, _LANE), lambda i, seed: (i, 0))],
            out_specs=pl.BlockSpec((block_rows, _LANE), lambda i, seed: (i, 0)),
        ),
        compiler_params=pltpu.CompilerParams(
            dimension_semantics=("parallel",),  # tiles are independent by construction
        ),
        cost_estimate=cost,
    )(seed_arr, x2d)

    out_flat = out2d.reshape(-1)
    if n_pad != n:
        out_flat = out_flat[:n]
    return out_flat.reshape(orig_shape)


if __name__ == "__main__":
    key = jax.random.PRNGKey(0)

    # NCHW input, consistent with the GAN generator usage.
    x = jax.random.normal(key, (2, 4, 16, 16), dtype=jnp.float32)

    # use_noise=True path (the hot path, runs the Pallas kernel)
    y = jax.block_until_ready(noise_forward(x, use_noise=True, sigma=0.2, seed=1234))
    assert y.shape == x.shape and y.dtype == x.dtype

    resid = y - x
    resid_std = float(jnp.std(resid))
    resid_mean = float(jnp.mean(resid))
    assert 0.05 < resid_std < 1.0, resid_std
    assert abs(resid_mean) < 0.05, resid_mean

    # a slightly larger map to exercise the big-block path
    x_big = jax.random.normal(jax.random.PRNGKey(1), (2, 64, 32, 32), dtype=jnp.float32)
    y_big = jax.block_until_ready(noise_forward(x_big, use_noise=True, sigma=0.2, seed=7))
    assert y_big.shape == x_big.shape
    assert 0.05 < float(jnp.std(y_big - x_big)) < 1.0

    # use_noise=False path is the identity
    y_id = jax.block_until_ready(noise_forward(x, use_noise=False))
    assert bool(jnp.all(y_id == x))

    print("KERNEL_OK")
</pallas_src>

<mosaic_0001>
module attributes {stable_mosaic.version = 11 : i64} {
  func.func @_noise_kernel(%arg0: i32, %arg1: memref<1xi32, #tpu.memory_space<smem>>, %arg2: memref<16x128xf32, #tpu.memory_space<vmem>>, %arg3: memref<16x128xf32, #tpu.memory_space<vmem>>) attributes {dimension_semantics = [#tpu.dimension_semantics<parallel>], iteration_bounds = array<i64: 1>, scalar_prefetch = 1 : i64, scratch_operands = 0 : i64, tpu.core_type = #tpu.core_type<tc>, window_params = [{transform_indices = @transform_0, window_bounds = array<i64: 16, 128>}, {transform_indices = @transform_1, window_bounds = array<i64: 16, 128>}]} {
    %c0 = arith.constant 0 : index
    %0 = memref.load %arg1[%c0] : memref<1xi32, #tpu.memory_space<smem>>
    %1 = tpu.iota {dimensions = array<i32: 0>} : vector<8x128xi32>
    %2 = tpu.iota {dimensions = array<i32: 1>} : vector<8x128xi32>
    %c2048_i32 = arith.constant 2048 : i32
    %3 = arith.muli %arg0, %c2048_i32 : i32
    %c128_i32 = arith.constant 128 : i32
    %4 = vector.broadcast %c128_i32 : i32 to vector<8x128xi32>
    %5 = arith.muli %1, %4 : vector<8x128xi32>
    %6 = vector.broadcast %3 : i32 to vector<8x128xi32>
    %7 = arith.addi %6, %5 : vector<8x128xi32>
    %8 = arith.addi %7, %2 : vector<8x128xi32>
    %9 = vector.broadcast %0 : i32 to vector<8x128xi32>
    %10 = arith.xori %8, %9 : vector<8x128xi32>
    %c16_i32 = arith.constant 16 : i32
    %11 = vector.broadcast %c16_i32 : i32 to vector<8x128xi32>
    %12 = arith.shrui %10, %11 : vector<8x128xi32>
    %13 = arith.xori %10, %12 : vector<8x128xi32>
    %c2146121005_i32 = arith.constant 2146121005 : i32
    %14 = vector.broadcast %c2146121005_i32 : i32 to vector<8x128xi32>
    %15 = arith.muli %13, %14 : vector<8x128xi32>
    %c15_i32 = arith.constant 15 : i32
    %16 = vector.broadcast %c15_i32 : i32 to vector<8x128xi32>
    %17 = arith.shrui %15, %16 : vector<8x128xi32>
    %18 = arith.xori %15, %17 : vector<8x128xi32>
    %c-2073254261_i32 = arith.constant -2073254261 : i32
    %19 = vector.broadcast %c-2073254261_i32 : i32 to vector<8x128xi32>
    %20 = arith.muli %18, %19 : vector<8x128xi32>
    %c16_i32_0 = arith.constant 16 : i32
    %21 = vector.broadcast %c16_i32_0 : i32 to vector<8x128xi32>
    %22 = arith.shrui %20, %21 : vector<8x128xi32>
    %23 = arith.xori %20, %22 : vector<8x128xi32>
    %c-1640531527_i32 = arith.constant -1640531527 : i32
    %24 = vector.broadcast %c-1640531527_i32 : i32 to vector<8x128xi32>
    %25 = arith.xori %23, %24 : vector<8x128xi32>
    %c16_i32_1 = arith.constant 16 : i32
    %26 = vector.broadcast %c16_i32_1 : i32 to vector<8x128xi32>
    %27 = arith.shrui %25, %26 : vector<8x128xi32>
    %28 = arith.xori %25, %27 : vector<8x128xi32>
    %c2146121005_i32_2 = arith.constant 2146121005 : i32
    %29 = vector.broadcast %c2146121005_i32_2 : i32 to vector<8x128xi32>
    %30 = arith.muli %28, %29 : vector<8x128xi32>
    %c15_i32_3 = arith.constant 15 : i32
    %31 = vector.broadcast %c15_i32_3 : i32 to vector<8x128xi32>
    %32 = arith.shrui %30, %31 : vector<8x128xi32>
    %33 = arith.xori %30, %32 : vector<8x128xi32>
    %c-2073254261_i32_4 = arith.constant -2073254261 : i32
    %34 = vector.broadcast %c-2073254261_i32_4 : i32 to vector<8x128xi32>
    %35 = arith.muli %33, %34 : vector<8x128xi32>
    %c16_i32_5 = arith.constant 16 : i32
    %36 = vector.broadcast %c16_i32_5 : i32 to vector<8x128xi32>
    %37 = arith.shrui %35, %36 : vector<8x128xi32>
    %38 = arith.xori %35, %37 : vector<8x128xi32>
    %c1779033703_i32 = arith.constant 1779033703 : i32
    %39 = vector.broadcast %c1779033703_i32 : i32 to vector<8x128xi32>
    %40 = arith.addi %23, %39 : vector<8x128xi32>
    %c16_i32_6 = arith.constant 16 : i32
    %41 = vector.broadcast %c16_i32_6 : i32 to vector<8x128xi32>
    %42 = arith.shrui %40, %41 : vector<8x128xi32>
    %43 = arith.xori %40, %42 : vector<8x128xi32>
    %c2146121005_i32_7 = arith.constant 2146121005 : i32
    %44 = vector.broadcast %c2146121005_i32_7 : i32 to vector<8x128xi32>
    %45 = arith.muli %43, %44 : vector<8x128xi32>
    %c15_i32_8 = arith.constant 15 : i32
    %46 = vector.broadcast %c15_i32_8 : i32 to vector<8x128xi32>
    %47 = arith.shrui %45, %46 : vector<8x128xi32>
    %48 = arith.xori %45, %47 : vector<8x128xi32>
    %c-2073254261_i32_9 = arith.constant -2073254261 : i32
    %49 = vector.broadcast %c-2073254261_i32_9 : i32 to vector<8x128xi32>
    %50 = arith.muli %48, %49 : vector<8x128xi32>
    %c16_i32_10 = arith.constant 16 : i32
    %51 = vector.broadcast %c16_i32_10 : i32 to vector<8x128xi32>
    %52 = arith.shrui %50, %51 : vector<8x128xi32>
    %53 = arith.xori %50, %52 : vector<8x128xi32>
    %c9_i32 = arith.constant 9 : i32
    %54 = vector.broadcast %c9_i32 : i32 to vector<8x128xi32>
    %55 = arith.shrui %38, %54 : vector<8x128xi32>
    %c1065353216_i32 = arith.constant 1065353216 : i32
    %56 = vector.broadcast %c1065353216_i32 : i32 to vector<8x128xi32>
    %57 = arith.ori %55, %56 : vector<8x128xi32>
    %58 = tpu.bitcast %57 : vector<8x128xi32> -> vector<8x128xf32>
    %cst = arith.constant 2.000000e+00 : f32
    %59 = vector.broadcast %cst : f32 to vector<8x128xf32>
    %60 = arith.subf %59, %58 : vector<8x128xf32>
    %c9_i32_11 = arith.constant 9 : i32
    %61 = vector.broadcast %c9_i32_11 : i32 to vector<8x128xi32>
    %62 = arith.shrui %53, %61 : vector<8x128xi32>
    %c1065353216_i32_12 = arith.constant 1065353216 : i32
    %63 = vector.broadcast %c1065353216_i32_12 : i32 to vector<8x128xi32>
    %64 = arith.ori %62, %63 : vector<8x128xi32>
    %65 = tpu.bitcast %64 : vector<8x128xi32> -> vector<8x128xf32>
    %cst_13 = arith.constant 1.000000e+00 : f32
    %66 = vector.broadcast %cst_13 : f32 to vector<8x128xf32>
    %67 = arith.subf %65, %66 : vector<8x128xf32>
    %68 = math.log %60 : vector<8x128xf32>
    %cst_14 = arith.constant -2.000000e+00 : f32
    %69 = vector.broadcast %cst_14 : f32 to vector<8x128xf32>
    %70 = arith.mulf %69, %68 : vector<8x128xf32>
    %71 = math.sqrt %70 : vector<8x128xf32>
    %cst_15 = arith.constant 6.28318548 : f32
    %72 = vector.broadcast %cst_15 : f32 to vector<8x128xf32>
    %73 = arith.mulf %72, %67 : vector<8x128xf32>
    %74 = math.cos %73 : vector<8x128xf32>
    %75 = arith.mulf %71, %74 : vector<8x128xf32>
    %76 = math.sin %73 : vector<8x128xf32>
    %77 = arith.mulf %71, %76 : vector<8x128xf32>
    %c0_16 = arith.constant 0 : index
    %c0_17 = arith.constant 0 : index
    %78 = vector.load %arg2[%c0_16, %c0_17] : memref<16x128xf32, #tpu.memory_space<vmem>>, vector<8x128xf32>
    %c8 = arith.constant 8 : index
    %c0_18 = arith.constant 0 : index
    %79 = vector.load %arg2[%c8, %c0_18] : memref<16x128xf32, #tpu.memory_space<vmem>>, vector<8x128xf32>
    %cst_19 = arith.constant 2.000000e-01 : f32
    %80 = vector.broadcast %cst_19 : f32 to vector<8x128xf32>
    %81 = arith.mulf %80, %75 : vector<8x128xf32>
    %82 = arith.addf %78, %81 : vector<8x128xf32>
    %c0_20 = arith.constant 0 : index
    %c0_21 = arith.constant 0 : index
    %83 = vector.load %arg3[%c0_20, %c0_21] : memref<16x128xf32, #tpu.memory_space<vmem>>, vector<8x128xf32>
    tpu.vector_store %arg3[%c0_20, %c0_21], %82 {strides = array<i32>} : memref<16x128xf32, #tpu.memory_space<vmem>>, vector<8x128xf32>,
    %cst_22 = arith.constant 2.000000e-01 : f32
    %84 = vector.broadcast %cst_22 : f32 to vector<8x128xf32>
    %85 = arith.mulf %84, %77 : vector<8x128xf32>
    %86 = arith.addf %79, %85 : vector<8x128xf32>
    %c8_23 = arith.constant 8 : index
    %c0_24 = arith.constant 0 : index
    %87 = vector.load %arg3[%c8_23, %c0_24] : memref<16x128xf32, #tpu.memory_space<vmem>>, vector<8x128xf32>
    tpu.vector_store %arg3[%c8_23, %c0_24], %86 {strides = array<i32>} : memref<16x128xf32, #tpu.memory_space<vmem>>, vector<8x128xf32>,
    return
  }
  func.func @transform_0(%arg0: i32, %arg1: memref<1xi32, #tpu.memory_space<smem>>) -> (i32, i32) {
    %c0_i32 = arith.constant 0 : i32
    %c0_i32_0 = arith.constant 0 : i32
    return %arg0, %c0_i32 : i32, i32
  }
  func.func @transform_1(%arg0: i32, %arg1: memref<1xi32, #tpu.memory_space<smem>>) -> (i32, i32) {
    %c0_i32 = arith.constant 0 : i32
    %c0_i32_0 = arith.constant 0 : i32
    return %arg0, %c0_i32 : i32, i32
  }
}

</mosaic_0001>

<llo_original>
// kernel: tpu_custom_call.1
$region0: #{tpu_custom_call.1}
  #allocation0 [shape = 'u32[]', space=smem, size = 0x4, offset = 0x4, fixed_abs, tag = 'smem constant byte address 0x4 - core index']
  #allocation1 [shape = 'u32[72,128]{1,0:T(1,128)}', space=vmem, size = 0x9000, scoped, tag = 'internal scratch']
  #allocation2 [shape = 's32[1]{0}', space=sflag, size = 0x4, scoped, tag = 'scoped memory for tpu_custom_call.1']
  #allocation3 [shape = 's32[1]{0:T(128)S(6)}', space=smem, size = 0x200, scoped, tag = 'prefetched SMEM operand 0']
  %s0 = inlined_call_operand.<no memory space> [shape: s32[1], index: 0, kind: input, shape index: {}]
  %s1 = inlined_call_operand.hbm [shape: f32[16,128], index: 1, kind: input, shape index: {}]
  %s2 = inlined_call_operand.hbm [shape: f32[16,128], index: 2, kind: output, shape index: {}]
  %s3 = sld [smem:[#allocation0]]
  $region18: #{tpu_custom_call.1} parent=0
    _
  %s5 = ssub.s32 1, %s3
  %s6 = scalar_select 0, %s5, %s3
  %7 = sst [smem:[#allocation3]] %s0
  $region1: #{tpu_custom_call.1} parent=0
    #allocation4 [shape = 'u8[8192]{0}', space=vmem, size = 0x2000, scoped, tag = 'input window, operand 1, single buffered']
    #allocation5 [shape = 's32[1]{0}', space=sflag, size = 0x4, scoped, tag = 'scoped memory for tpu_custom_call.1']
    #allocation6 [shape = 's32[1]{0}', space=sflag, size = 0x4, scoped, tag = 'scoped memory for tpu_custom_call.1']
    #allocation7 [shape = 'u8[8192]{0}', space=vmem, size = 0x2000, scoped, tag = 'output window, operand 0, single buffered']
    %8 = vsyncpa [#allocation5], 0
    %9 = vsyncpa [#allocation6], 0
    // Predicated region
    $region2: #{tpu_custom_call.1} parent=1 // pred_check
      _
    $region3: #{tpu_custom_call.1} parent=1 // pred_check_branch
      %11 = sbr.rel (0) target = $region5
    $region4: #{tpu_custom_call.1} parent=1 // pred_region
      %13 = vsyncadd [#allocation5], 0
      %s14 = sshll.u32 %s1, 4
      %s15 = int_to_ptr.hbm [resolvable:$true] %s14
      %s16 = sshll.u32 [#allocation4], 4
      %s17 = int_to_ptr.vmem [resolvable:$true] %s16
      %22 = dma.hbm_to_vmem [thread:$0]  %s15, 256, %s17, [#allocation5], 128, 128, 8
    $region5: #{tpu_custom_call.1} parent=1 // pred_fallthru
      _
    // Predicated region
    $region6: #{tpu_custom_call.1} parent=1 // pred_check
      _
    $region7: #{tpu_custom_call.1} parent=1 // pred_check_branch
      %24 = sbr.rel (0) target = $region9
    $region8: #{tpu_custom_call.1} parent=1 // pred_region
      %26 = dma.done [#allocation5], 256
    $region9: #{tpu_custom_call.1} parent=1 // pred_fallthru
      _
    %s27 = sld [smem:[#allocation3]]
    %v28 = vlaneseq
    %v29 = vshrl.u32 %v28, 7
    %v30 = vlaneseq
    %v31 = vand.u32 %v30, 127
    %s32 = smul.u32 0, 2048
    %v33 = vmul.u32 %v29, 128
    %v34 = vstv %s32
    %v35 = vadd.s32 %v34, %v33
    %v36 = vadd.s32 %v35, %v31
    %v37 = vstv %s27
    %v38 = vxor.u32 %v36, %v37
    %v39 = vshrl.u32 %v38, 16
    %v40 = vxor.u32 %v38, %v39
    %v41 = vmul.u32 %v40, 2146121005
    %v42 = vshrl.u32 %v41, 15
    %v43 = vxor.u32 %v41, %v42
    %v44 = vmul.u32 %v43, 2221713035
    %v45 = vshrl.u32 %v44, 16
    %v46 = vxor.u32 %v44, %v45
    %v47 = vxor.u32 %v46, 2654435769
    %v48 = vshrl.u32 %v47, 16
    %v49 = vxor.u32 %v47, %v48
    %v50 = vmul.u32 %v49, 2146121005
    %v51 = vshrl.u32 %v50, 15
    %v52 = vxor.u32 %v50, %v51
    %v53 = vmul.u32 %v52, 2221713035
    %v54 = vshrl.u32 %v53, 16
    %v55 = vxor.u32 %v53, %v54
    %v56 = vadd.s32 %v46, 1779033703
    %v57 = vshrl.u32 %v56, 16
    %v58 = vxor.u32 %v56, %v57
    %v59 = vmul.u32 %v58, 2146121005
    %v60 = vshrl.u32 %v59, 15
    %v61 = vxor.u32 %v59, %v60
    %v62 = vmul.u32 %v61, 2221713035
    %v63 = vshrl.u32 %v62, 16
    %v64 = vxor.u32 %v62, %v63
    %v65 = vshrl.u32 %v55, 9
    %v66 = vor.u32 %v65, 1065353216
    %v68 = vsub.f32 2.0, %v66
    %v69 = vshrl.u32 %v64, 9
    %v70 = vor.u32 %v69, 1065353216
    %v72 = vsub.f32 %v70, 1.0
    %v73 = vlog2.pop %v68
    %v74 = vmul.f32 %v73, 0.6931472
    %v75 = vmul.f32 %v74, -2.0
    %v76 = vrsqrt.pop %v75
    %v77 = vmul.f32 %v76, %v75
    %v78 = vmul.f32 %v77, %v76
    %v79 = vmul.f32 0.5, %v78
    %v80 = vsub.f32 1.5, %v79
    %v81 = vmul.f32 %v76, %v80
    %v82 = vmul.f32 %v75, %v81
    %vm83 = vcmp.eq.f32.partialorder %v75, inf
    %v84 = vsel %vm83, %v75, %v82
    %vm85 = vcmp.eq.f32.partialorder %v75, 0.0
    %v86 = vand.u32 %v75, 2147483648
    %v87 = vsel %vm85, %v86, %v84
    %v88 = vmul.f32 %v72, 6.2831855
    %v89 = vand.u32 2147483647, %v88
    %vm90 = vcmp.le.f32.partialorder %v89, 0.7853982
    %vm91 = vcmp.lt.s32.totalorder %v88, 0
    %v92 = vand.u32 %v88, 2139095040
    %v93 = vshrl.u32 %v92, 23
    %v94 = vsub.s32 %v93, 127
    %v95 = vand.u32 2147483647, %v88
    %v96 = vand.u32 %v95, 8388607
    %v97 = vor.u32 %v96, 8388608
    %v98 = vsub.s32 0, %v97
    %v99 = vadd.s32 %v94, 1
    %vm100 = vcmp.gt.s32.totalorder %v99, 0
    %v101 = vsel %vm100, %v99, 0
    %v102 = vshrl.u32 %v101, 5
    %v103 = vand.u32 %v101, 31
    %v104 = vsub.s32 32, %v103
    %v105 = vshrl.u32 683565275, %v104
    %v106 = vshll.u32 683565275, %v103
    %v107 = vshrl.u32 2475754826, %v104
    %v108 = vor.u32 %v106, %v107
    %v109 = vshll.u32 2475754826, %v103
    %v110 = vshrl.u32 2131351028, %v104
    %v111 = vor.u32 %v109, %v110
    %v112 = vshll.u32 2131351028, %v103
    %v113 = vshrl.u32 2102212464, %v104
    %v114 = vor.u32 %v112, %v113
    %v115 = vshll.u32 2102212464, %v103
    %v116 = vshrl.u32 920167782, %v104
    %v117 = vor.u32 %v115, %v116
    %v118 = vshll.u32 920167782, %v103
    %v119 = vshrl.u32 1326507024, %v104
    %v120 = vor.u32 %v118, %v119
    %vm121 = vcmp.lt.s32.totalorder %v102, 1
    %vm122 = vcmp.lt.s32.totalorder %v102, 2
    %vm123 = vcmp.lt.s32.totalorder %v102, 3
    %vm124 = vcmp.lt.s32.totalorder %v102, 4
    %v125 = vsel %vm121, %v105, %v108
    %v126 = vsel %vm124, %v114, 2102212464
    %v127 = vsel %vm123, %v111, %v126
    %v128 = vsel %vm122, %v125, %v127
    %v129 = vsel %vm121, %v108, %v111
    %v130 = vsel %vm124, %v117, 920167782
    %v131 = vsel %vm123, %v114, %v130
    %v132 = vsel %vm122, %v129, %v131
    %v133 = vsel %vm121, %v111, %v114
    %v134 = vsel %vm124, %v120, 1326507024
    %v135 = vsel %vm123, %v117, %v134
    %v136 = vsel %vm122, %v133, %v135
    %v137 = vshll.u32 %v97, 8
    %v138 = vand.u32 %v137, 65535
    %v139 = vshrl.u32 %v137, 16
    %v140 = vand.u32 %v136, 65535
    %v141 = vshrl.u32 %v136, 16
    %v142 = vmul.u32 %v138, %v140
    %v143 = vmul.u32 %v138, %v141
    %v144 = vmul.u32 %v139, %v140
    %v145 = vmul.u32 %v139, %v141
    %v146 = vshll.u32 %v143, 16
    %v147 = vshrl.u32 %v143, 16
    %v148 = vshll.u32 %v144, 16
    %v149 = vshrl.u32 %v144, 16
    %vm150 = vc.u32 %v142, %v146
    %v151 = vsel %vm150, 1, 0
    %v152 = vadd.s32 %v142, %v146
    %v153 = vadd.s32 %v145, %v151
    %vm154 = vc.u32 %v152, %v148
    %v155 = vsel %vm154, 1, 0
    %v156 = vadd.s32 %v152, %v148
    %v157 = vadd.s32 %v153, %v155
    %v158 = vadd.s32 %v157, %v147
    %v159 = vadd.s32 %v158, %v149
    %v160 = vand.u32 %v137, 65535
    %v161 = vshrl.u32 %v137, 16
    %v162 = vand.u32 %v132, 65535
    %v163 = vshrl.u32 %v132, 16
    %v164 = vmul.u32 %v160, %v162
    %v165 = vmul.u32 %v160, %v163
    %v166 = vmul.u32 %v161, %v162
    %v167 = vmul.u32 %v161, %v163
    %v168 = vshll.u32 %v165, 16
    %v169 = vshrl.u32 %v165, 16
    %v170 = vshll.u32 %v166, 16
    %v171 = vshrl.u32 %v166, 16
    %vm172 = vc.u32 %v164, %v168
    %v173 = vsel %vm172, 1, 0
    %v174 = vadd.s32 %v164, %v168
    %v175 = vadd.s32 %v167, %v173
    %vm176 = vc.u32 %v174, %v170
    %v177 = vsel %vm176, 1, 0
    %v178 = vadd.s32 %v174, %v170
    %v179 = vadd.s32 %v175, %v177
    %v180 = vadd.s32 %v179, %v169
    %v181 = vadd.s32 %v180, %v171
    %v182 = vmul.u32 %v137, %v128
    %v183 = vadd.s32 %v159, %v178
    %vm184 = vc.u32 %v159, %v178
    %v185 = vadd.s32 %v181, 1
    %v186 = vsel %vm184, %v185, %v181
    %v187 = vadd.s32 %v182, %v186
    %v188 = vadd.s32 %v187, 536870912
    %v189 = vshrl.u32 %v188, 30
    %v190 = vshll.u32 %v189, 30
    %v191 = vsub.s32 %v187, %v190
    %vm192 = vcmp.lt.s32.totalorder %v191, 0
    %v193 = vsub.s32 0, %v191
    %v194 = vsel %vm192, %v193, %v191
    %v195 = vclz %v194
    %v196 = vsub.s32 %v195, 2
    %vm197 = vcmp.gt.s32.totalorder 0, %v196
    %v198 = vsel %vm197, 0, %v196
    %v199 = vsub.s32 32, %v198
    %v200 = vshll.u32 %v191, %v198
    %v201 = vshrl.u32 %v183, %v199
    %v202 = vor.u32 %v200, %v201
    %v203 = vsub.s32 4294967266, %v198
    %v204 = vadd.s32 %v203, 127
    %v205 = vshll.u32 %v204, 23
    %v206 = vor.u32 4788187, %v205
    %v207 = vand.u32 2147483647, %v206
    %v209 = vcvt.s32.f32 %v202
    %v210 = vmul.f32 %v209, %v207
    %v211 = vxor.u32 %v210, 2147483648
    %v212 = vsel %vm91, %v211, %v210
    %v213 = vsub.s32 4, %v189
    %v214 = vsel %vm91, %v213, %v189
    %v215 = vsel %vm90, %v88, %v212
    %v216 = vsel %vm90, 0, %v214
    %v217 = vmul.f32 %v215, %v215
    %v218 = vmul.f32 %v217, -0.001358992
    %v219 = vadd.f32 %v218, 0.041655596
    %v220 = vmul.f32 %v217, %v219
    %v221 = vadd.f32 %v220, -0.4999988
    %v222 = vmul.f32 %v217, %v221
    %v223 = vadd.f32 1.0, %v222
    %v224 = vmul.f32 %v215, %v215
    %v225 = vmul.f32 %v224, -0.00019511016
    %v226 = vadd.f32 %v225, 0.008332121
    %v227 = vmul.f32 %v224, %v226
    %v228 = vadd.f32 %v227, -0.16666654
    %v229 = vmul.f32 %v224, %v228
    %v230 = vadd.f32 %v229, 1.0
    %v231 = vmul.f32 %v230, %v215
    %vm232 = vweird.f32 %v88
    %v233 = vand.u32 %v216, 3
    %vm234 = vcmp.lt.s32.totalorder %v233, 2
    %vm235 = vcmp.eq.s32.totalorder %v233, 0
    %v236 = vxor.u32 %v231, 2147483648
    %v237 = vsel %vm235, %v223, %v236
    %vm238 = vcmp.eq.s32.totalorder %v233, 2
    %v239 = vxor.u32 %v223, 2147483648
    %v240 = vsel %vm238, %v239, %v231
    %v241 = vsel %vm234, %v237, %v240
    %v242 = vsel %vm232, nan, %v241
    %v243 = vmul.f32 %v87, %v242
    %v244 = vand.u32 2147483647, %v88
    %vm245 = vcmp.le.f32.partialorder %v244, 0.7853982
    %vm246 = vcmp.lt.s32.totalorder %v88, 0
    %v247 = vand.u32 %v88, 2139095040
    %v248 = vshrl.u32 %v247, 23
    %v249 = vsub.s32 %v248, 127
    %v250 = vand.u32 2147483647, %v88
    %v251 = vand.u32 %v250, 8388607
    %v252 = vor.u32 %v251, 8388608
    %v253 = vsub.s32 0, %v252
    %v254 = vadd.s32 %v249, 1
    %vm255 = vcmp.gt.s32.totalorder %v254, 0
    %v256 = vsel %vm255, %v254, 0
    %v257 = vshrl.u32 %v256, 5
    %v258 = vand.u32 %v256, 31
    %v259 = vsub.s32 32, %v258
    %v260 = vshrl.u32 683565275, %v259
    %v261 = vshll.u32 683565275, %v258
    %v262 = vshrl.u32 2475754826, %v259
    %v263 = vor.u32 %v261, %v262
    %v264 = vshll.u32 2475754826, %v258
    %v265 = vshrl.u32 2131351028, %v259
    %v266 = vor.u32 %v264, %v265
    %v267 = vshll.u32 2131351028, %v258
    %v268 = vshrl.u32 2102212464, %v259
    %v269 = vor.u32 %v267, %v268
    %v270 = vshll.u32 2102212464, %v258
    %v271 = vshrl.u32 920167782, %v259
    %v272 = vor.u32 %v270, %v271
    %v273 = vshll.u32 920167782, %v258
    %v274 = vshrl.u32 1326507024, %v259
    %v275 = vor.u32 %v273, %v274
    %vm276 = vcmp.lt.s32.totalorder %v257, 1
    %vm277 = vcmp.lt.s32.totalorder %v257, 2
    %vm278 = vcmp.lt.s32.totalorder %v257, 3
    %vm279 = vcmp.lt.s32.totalorder %v257, 4
    %v280 = vsel %vm276, %v260, %v263
    %v281 = vsel %vm279, %v269, 2102212464
    %v282 = vsel %vm278, %v266, %v281
    %v283 = vsel %vm277, %v280, %v282
    %v284 = vsel %vm276, %v263, %v266
    %v285 = vsel %vm279, %v272, 920167782
    %v286 = vsel %vm278, %v269, %v285
    %v287 = vsel %vm277, %v284, %v286
    %v288 = vsel %vm276, %v266, %v269
    %v289 = vsel %vm279, %v275, 1326507024
    %v290 = vsel %vm278, %v272, %v289
    %v291 = vsel %vm277, %v288, %v290
    %v292 = vshll.u32 %v252, 8
    %v293 = vand.u32 %v292, 65535
    %v294 = vshrl.u32 %v292, 16
    %v295 = vand.u32 %v291, 65535
    %v296 = vshrl.u32 %v291, 16
    %v297 = vmul.u32 %v293, %v295
    %v298 = vmul.u32 %v293, %v296
    %v299 = vmul.u32 %v294, %v295
    %v300 = vmul.u32 %v294, %v296
    %v301 = vshll.u32 %v298, 16
    %v302 = vshrl.u32 %v298, 16
    %v303 = vshll.u32 %v299, 16
    %v304 = vshrl.u32 %v299, 16
    %vm305 = vc.u32 %v297, %v301
    %v306 = vsel %vm305, 1, 0
    %v307 = vadd.s32 %v297, %v301
    %v308 = vadd.s32 %v300, %v306
    %vm309 = vc.u32 %v307, %v303
    %v310 = vsel %vm309, 1, 0
    %v311 = vadd.s32 %v307, %v303
    %v312 = vadd.s32 %v308, %v310
    %v313 = vadd.s32 %v312, %v302
    %v314 = vadd.s32 %v313, %v304
    %v315 = vand.u32 %v292, 65535
    %v316 = vshrl.u32 %v292, 16
    %v317 = vand.u32 %v287, 65535
    %v318 = vshrl.u32 %v287, 16
    %v319 = vmul.u32 %v315, %v317
    %v320 = vmul.u32 %v315, %v318
    %v321 = vmul.u32 %v316, %v317
    %v322 = vmul.u32 %v316, %v318
    %v323 = vshll.u32 %v320, 16
    %v324 = vshrl.u32 %v320, 16
    %v325 = vshll.u32 %v321, 16
    %v326 = vshrl.u32 %v321, 16
    %vm327 = vc.u32 %v319, %v323
    %v328 = vsel %vm327, 1, 0
    %v329 = vadd.s32 %v319, %v323
    %v330 = vadd.s32 %v322, %v328
    %vm331 = vc.u32 %v329, %v325
    %v332 = vsel %vm331, 1, 0
    %v333 = vadd.s32 %v329, %v325
    %v334 = vadd.s32 %v330, %v332
    %v335 = vadd.s32 %v334, %v324
    %v336 = vadd.s32 %v335, %v326
    %v337 = vmul.u32 %v292, %v283
    %v338 = vadd.s32 %v314, %v333
    %vm339 = vc.u32 %v314, %v333
    %v340 = vadd.s32 %v336, 1
    %v341 = vsel %vm339, %v340, %v336
    %v342 = vadd.s32 %v337, %v341
    %v343 = vadd.s32 %v342, 536870912
    %v344 = vshrl.u32 %v343, 30
    %v345 = vshll.u32 %v344, 30
    %v346 = vsub.s32 %v342, %v345
    %vm347 = vcmp.lt.s32.totalorder %v346, 0
    %v348 = vsub.s32 0, %v346
    %v349 = vsel %vm347, %v348, %v346
    %v350 = vclz %v349
    %v351 = vsub.s32 %v350, 2
    %vm352 = vcmp.gt.s32.totalorder 0, %v351
    %v353 = vsel %vm352, 0, %v351
    %v354 = vsub.s32 32, %v353
    %v355 = vshll.u32 %v346, %v353
    %v356 = vshrl.u32 %v338, %v354
    %v357 = vor.u32 %v355, %v356
    %v358 = vsub.s32 4294967266, %v353
    %v359 = vadd.s32 %v358, 127
    %v360 = vshll.u32 %v359, 23
    %v361 = vor.u32 4788187, %v360
    %v362 = vand.u32 2147483647, %v361
    %v364 = vcvt.s32.f32 %v357
    %v365 = vmul.f32 %v364, %v362
    %v366 = vxor.u32 %v365, 2147483648
    %v367 = vsel %vm246, %v366, %v365
    %v368 = vsub.s32 4, %v344
    %v369 = vsel %vm246, %v368, %v344
    %v370 = vsel %vm245, %v88, %v367
    %v371 = vsel %vm245, 0, %v369
    %v372 = vmul.f32 %v370, %v370
    %v373 = vmul.f32 %v372, -0.001358992
    %v374 = vadd.f32 %v373, 0.041655596
    %v375 = vmul.f32 %v372, %v374
    %v376 = vadd.f32 %v375, -0.4999988
    %v377 = vmul.f32 %v372, %v376
    %v378 = vadd.f32 1.0, %v377
    %v379 = vmul.f32 %v370, %v370
    %v380 = vmul.f32 %v379, -0.00019511016
    %v381 = vadd.f32 %v380, 0.008332121
    %v382 = vmul.f32 %v379, %v381
    %v383 = vadd.f32 %v382, -0.16666654
    %v384 = vmul.f32 %v379, %v383
    %v385 = vadd.f32 %v384, 1.0
    %v386 = vmul.f32 %v385, %v370
    %vm387 = vweird.f32 %v88
    %v388 = vadd.s32 %v371, 3
    %v389 = vand.u32 %v388, 3
    %vm390 = vcmp.lt.s32.totalorder %v389, 2
    %vm391 = vcmp.eq.s32.totalorder %v389, 0
    %v392 = vxor.u32 %v386, 2147483648
    %v393 = vsel %vm391, %v378, %v392
    %vm394 = vcmp.eq.s32.totalorder %v389, 2
    %v395 = vxor.u32 %v378, 2147483648
    %v396 = vsel %vm394, %v395, %v386
    %v397 = vsel %vm390, %v393, %v396
    %v398 = vsel %vm387, nan, %v397
    %v399 = vmul.f32 %v87, %v398
    %v400 = vld [vmem:[#allocation4] sm:$0xff]
    %v401 = vld [vmem:[#allocation4 + $0x8] sm:$0xff]
    %v402 = vmul.f32 %v243, 0.2
    %v403 = vadd.f32 %v400, %v402
    %404 = vst [vmem:[#allocation7] sm:$0xff] %v403
    %v405 = vmul.f32 %v399, 0.2
    %v406 = vadd.f32 %v401, %v405
    %407 = vst [vmem:[#allocation7 + $0x8] sm:$0xff] %v406
    // Predicated region
    $region10: #{tpu_custom_call.1} parent=1 // pred_check
      _
    $region11: #{tpu_custom_call.1} parent=1 // pred_check_branch
      %409 = sbr.rel (0) target = $region13
    $region12: #{tpu_custom_call.1} parent=1 // pred_region
      %411 = vsyncadd [#allocation6], 0
      %s412 = sshll.u32 [#allocation7], 4
      %s413 = int_to_ptr.vmem [resolvable:$true] %s412
      %s414 = sshll.u32 %s2, 4
      %s415 = int_to_ptr.hbm [resolvable:$true] %s414
      %420 = dma.vmem_to_hbm [thread:$0]  %s413, 256, %s415, [#allocation6], 128, 128, 8
    $region13: #{tpu_custom_call.1} parent=1 // pred_fallthru
      _
    // Predicated region
    $region14: #{tpu_custom_call.1} parent=1 // pred_check
      _
    $region15: #{tpu_custom_call.1} parent=1 // pred_check_branch
      %422 = sbr.rel (0) target = $region17
    $region16: #{tpu_custom_call.1} parent=1 // pred_region
      %424 = dma.done [#allocation6], 256
    $region17: #{tpu_custom_call.1} parent=1 // pred_fallthru
      _
    %425 = vsyncpa [#allocation5], 1
    %426 = vsyncpa [#allocation6], 1

</llo_original>
